<compile_context>
chip_gen: v5e
topology: v5e:2x2
jax: 0.10.0
libtpu: 0.0.40
codegen_flags: <defaults>
</compile_context>

<pallas_src>
import jax
import jax.numpy as jnp
from jax.experimental import pallas as pl
from jax.experimental.pallas import tpu as pltpu

IN_FEATURES = 1280
NUM_CLASS = 136
PADDED_OUT = 256  # pad 136 -> 256 lanes: dense MXU pass + unmasked vector stores


def _head_kernel(x_ref, w_ref, b_ref, o_ref):
    # x_ref: (TN, HW, C)  channels on the lane axis
    # w_ref: (C, PADDED_OUT)   b_ref: (1, PADDED_OUT)   o_ref: (TN, PADDED_OUT)
    hw = x_ref.shape[1]
    # Global average pool over the spatial (sublane) axis with f32 accumulation.
    pooled = jnp.sum(x_ref[...], axis=1, dtype=jnp.float32) * (1.0 / hw)  # (TN, C)
    logits = jnp.dot(pooled, w_ref[...].astype(jnp.float32),
                     preferred_element_type=jnp.float32)                   # MXU
    o_ref[...] = (logits + b_ref[...].astype(jnp.float32)).astype(o_ref.dtype)


def efficientnet_forward(x_nchw, fc_weight, fc_bias, *, block_bytes=12 * 1024 * 1024):
    """x_nchw: (N, 1280, H, W). fc_weight: (NUM_CLASS, 1280) PyTorch layout.
    fc_bias: (NUM_CLASS,). Returns (N, NUM_CLASS)."""
    n, c, h, w = x_nchw.shape
    assert c == IN_FEATURES, "features.size(1) == self.in_features"
    hw = h * w
    out_dtype = jnp.result_type(x_nchw.dtype, fc_weight.dtype)

    # NCHW -> (N, HW, C): put the 1280 channels on the lane axis.
    x = jnp.transpose(x_nchw.reshape(n, c, hw), (0, 2, 1))

    # Pad FC params 136 -> 256 output columns (sliced back after the kernel).
    w_t = jnp.zeros((IN_FEATURES, PADDED_OUT), dtype=fc_weight.dtype)
    w_t = w_t.at[:, :NUM_CLASS].set(fc_weight.T)
    b_pad = jnp.zeros((1, PADDED_OUT), dtype=fc_bias.dtype)
    b_pad = b_pad.at[:, :NUM_CLASS].set(fc_bias[None, :])

    # Batch tile: largest multiple of 8 whose x block stays <= block_bytes, so
    # double-buffering (2x block) fits comfortably on every TPU generation.
    itemsize = jnp.dtype(x.dtype).itemsize
    per_sample_bytes = hw * c * itemsize
    tn = max(8, (block_bytes // per_sample_bytes) // 8 * 8)
    tn = min(tn, 512)
    if n <= tn:
        tn = n
        n_pad = n
    else:
        n_pad = pl.cdiv(n, tn) * tn
    if n_pad != n:
        x = jnp.pad(x, ((0, n_pad - n), (0, 0), (0, 0)))

    grid = (n_pad // tn,)

    cost = pl.CostEstimate(
        flops=2 * n_pad * c * PADDED_OUT + n_pad * hw * c,
        transcendentals=0,
        bytes_accessed=(n_pad * hw * c * itemsize
                        + IN_FEATURES * PADDED_OUT * w_t.dtype.itemsize
                        + PADDED_OUT * b_pad.dtype.itemsize
                        + n_pad * PADDED_OUT * jnp.dtype(out_dtype).itemsize),
    )

    out_padded = pl.pallas_call(
        _head_kernel,
        out_shape=jax.ShapeDtypeStruct((n_pad, PADDED_OUT), out_dtype),
        grid=grid,
        in_specs=[
            pl.BlockSpec((tn, hw, c), lambda i: (i, 0, 0)),           # activations
            pl.BlockSpec((IN_FEATURES, PADDED_OUT), lambda i: (0, 0)),  # weight (resident)
            pl.BlockSpec((1, PADDED_OUT), lambda i: (0, 0)),            # bias   (resident)
        ],
        out_specs=pl.BlockSpec((tn, PADDED_OUT), lambda i: (i, 0)),
        compiler_params=pltpu.CompilerParams(
            dimension_semantics=("parallel",),       # shard batch across TCs (v7x)
            vmem_limit_bytes=64 * 1024 * 1024,
        ),
        cost_estimate=cost,
    )(x, w_t, b_pad)

    return out_padded[:n, :NUM_CLASS]


if __name__ == "__main__":
    key = jax.random.PRNGKey(0)
    kx, kw = jax.random.split(key)

    # Small but shape-consistent input: channels MUST be 1280 (asserted above).
    N, H, W = 2, 4, 4
    x = jax.random.normal(kx, (N, IN_FEATURES, H, W), dtype=jnp.float32)

    # init_params(): Linear weight ~ N(0, 0.01), bias = 0.
    fc_weight = 0.01 * jax.random.normal(kw, (NUM_CLASS, IN_FEATURES), dtype=jnp.float32)
    fc_bias = jnp.zeros((NUM_CLASS,), dtype=jnp.float32)

    out = efficientnet_forward(x, fc_weight, fc_bias)
    out = jax.block_until_ready(out)

    # Plain-JAX reference (same math) to validate the kernel.
    ref = jnp.mean(x, axis=(2, 3)) @ fc_weight.T + fc_bias
    assert out.shape == (N, NUM_CLASS)
    assert jnp.allclose(out, ref, atol=1e-4, rtol=1e-4)

    print("KERNEL_OK")
</pallas_src>

<mosaic_0001>
module attributes {stable_mosaic.version = 11 : i64} {
  func.func @_head_kernel(%arg0: i32, %arg1: memref<2x16x1280xf32, #tpu.memory_space<vmem>>, %arg2: memref<1280x256xf32, #tpu.memory_space<vmem>>, %arg3: memref<1x256xf32, #tpu.memory_space<vmem>>, %arg4: memref<2x256xf32, #tpu.memory_space<vmem>>) attributes {dimension_semantics = [#tpu.dimension_semantics<parallel>], iteration_bounds = array<i64: 1>, scalar_prefetch = 0 : i64, scratch_operands = 0 : i64, tpu.core_type = #tpu.core_type<tc>, window_params = [{transform_indices = @transform_0, window_bounds = array<i64: 2, 16, 1280>}, {pipeline_mode = #tpu.pipeline_mode<synchronous>, transform_indices = @transform_1, window_bounds = array<i64: 1280, 256>}, {pipeline_mode = #tpu.pipeline_mode<synchronous>, transform_indices = @transform_2, window_bounds = array<i64: 1, 256>}, {transform_indices = @transform_3, window_bounds = array<i64: 2, 256>}]} {
    %c0 = arith.constant 0 : index
    %c0_0 = arith.constant 0 : index
    %c0_1 = arith.constant 0 : index
    %0 = vector.load %arg1[%c0, %c0_0, %c0_1] : memref<2x16x1280xf32, #tpu.memory_space<vmem>>, vector<2x16x1280xf32>
    %cst = arith.constant dense<0.000000e+00> : vector<2x1280xf32>
    %1 = vector.multi_reduction <add>, %0, %cst [1] : vector<2x16x1280xf32> to vector<2x1280xf32>
    %cst_2 = arith.constant 6.250000e-02 : f32
    %2 = vector.broadcast %cst_2 : f32 to vector<2x1280xf32>
    %3 = arith.mulf %1, %2 : vector<2x1280xf32>
    %c0_3 = arith.constant 0 : index
    %c0_4 = arith.constant 0 : index
    %4 = vector.load %arg2[%c0_3, %c0_4] : memref<1280x256xf32, #tpu.memory_space<vmem>>, vector<1280x256xf32>
    %cst_5 = arith.constant dense<0.000000e+00> : vector<2x256xf32>
    %5 = tpu.matmul %3, %4, %cst_5 {dimension_numbers = #tpu.dot_dimension_numbers<[1], [0], [0], [1], [0, 0, 1, 1], [], []>} : vector<2x1280xf32>, vector<1280x256xf32>, vector<2x256xf32> -> vector<2x256xf32>
    %c0_6 = arith.constant 0 : index
    %c0_7 = arith.constant 0 : index
    %6 = vector.load %arg3[%c0_6, %c0_7] : memref<1x256xf32, #tpu.memory_space<vmem>>, vector<1x256xf32>
    %7 = vector.broadcast %6 : vector<1x256xf32> to vector<2x256xf32>
    %8 = arith.addf %5, %7 : vector<2x256xf32>
    %c0_8 = arith.constant 0 : index
    %c0_9 = arith.constant 0 : index
    %9 = vector.load %arg4[%c0_8, %c0_9] : memref<2x256xf32, #tpu.memory_space<vmem>>, vector<2x256xf32>
    tpu.vector_store %arg4[%c0_8, %c0_9], %8 {strides = array<i32>} : memref<2x256xf32, #tpu.memory_space<vmem>>, vector<2x256xf32>,
    return
  }
  func.func @transform_0(%arg0: i32) -> (i32, i32, i32) {
    %c0_i32 = arith.constant 0 : i32
    %c0_i32_0 = arith.constant 0 : i32
    %c0_i32_1 = arith.constant 0 : i32
    return %arg0, %c0_i32, %c0_i32_0 : i32, i32, i32
  }
  func.func @transform_1(%arg0: i32) -> (i32, i32) {
    %c0_i32 = arith.constant 0 : i32
    %c0_i32_0 = arith.constant 0 : i32
    %c0_i32_1 = arith.constant 0 : i32
    return %c0_i32, %c0_i32_0 : i32, i32
  }
  func.func @transform_2(%arg0: i32) -> (i32, i32) {
    %c0_i32 = arith.constant 0 : i32
    %c0_i32_0 = arith.constant 0 : i32
    %c0_i32_1 = arith.constant 0 : i32
    return %c0_i32, %c0_i32_0 : i32, i32
  }
  func.func @transform_3(%arg0: i32) -> (i32, i32) {
    %c0_i32 = arith.constant 0 : i32
    %c0_i32_0 = arith.constant 0 : i32
    return %arg0, %c0_i32 : i32, i32
  }
}

</mosaic_0001>

<llo_original>
// kernel: tpu_custom_call.1
$region0: #{tpu_custom_call.1}
  #allocation0 [shape = 'u32[]', space=smem, size = 0x4, offset = 0x4, fixed_abs, tag = 'smem constant byte address 0x4 - core index']
  #allocation1 [shape = 'u32[72,128]{1,0:T(1,128)}', space=vmem, size = 0x9000, scoped, tag = 'internal scratch']
  %s0 = inlined_call_operand.hbm [shape: f32[2,16,1280], index: 0, kind: input, shape index: {}]
  %s1 = inlined_call_operand.hbm [shape: f32[1280,256], index: 1, kind: input, shape index: {}]
  %s2 = inlined_call_operand.hbm [shape: f32[1,256], index: 2, kind: input, shape index: {}]
  %s3 = inlined_call_operand.hbm [shape: f32[2,256], index: 3, kind: output, shape index: {}]
  %s4 = sld [smem:[#allocation0]]
  $region34: #{tpu_custom_call.1} parent=0
    _
  %s6 = ssub.s32 1, %s4
  %s7 = scalar_select 0, %s6, %s4
  $region1: #{tpu_custom_call.1} parent=0
    #allocation2 [shape = 'u8[163840]{0}', space=vmem, size = 0x28000, scoped, tag = 'input window, operand 0, single buffered']
    #allocation3 [shape = 's32[1]{0}', space=sflag, size = 0x4, scoped, tag = 'scoped memory for tpu_custom_call.1']
    #allocation4 [shape = 's32[1]{0}', space=sflag, size = 0x4, scoped, tag = 'scoped memory for tpu_custom_call.1']
    #allocation5 [shape = 'u8[1310720]{0}', space=vmem, size = 0x140000, scoped, tag = 'input window, operand 1, single buffered']
    #allocation6 [shape = 's32[1]{0}', space=sflag, size = 0x4, scoped, tag = 'scoped memory for tpu_custom_call.1']
    #allocation7 [shape = 'u8[1024]{0}', space=vmem, size = 0x400, scoped, tag = 'input window, operand 2, single buffered']
    #allocation8 [shape = 'u8[2048]{0}', space=vmem, size = 0x800, scoped, tag = 'output window, operand 0, single buffered']
    %8 = vsyncpa [#allocation3], 0
    %9 = vsyncpa [#allocation6], 0
    %10 = vsyncpa [#allocation4], 0
    // Predicated region
    $region2: #{tpu_custom_call.1} parent=1 // pred_check
      _
    $region3: #{tpu_custom_call.1} parent=1 // pred_check_branch
      %12 = sbr.rel (0) target = $region5
    $region4: #{tpu_custom_call.1} parent=1 // pred_region
      %14 = vsyncadd [#allocation3], 0
      %s15 = sshll.u32 %s0, 4
      %s16 = int_to_ptr.hbm [resolvable:$true] %s15
      %s17 = sshll.u32 [#allocation2], 4
      %s18 = int_to_ptr.vmem [resolvable:$true] %s17
      %23 = dma.hbm_to_vmem [thread:$0]  %s16, 5120, %s18, [#allocation3], 1280, 1280, 80
    $region5: #{tpu_custom_call.1} parent=1 // pred_fallthru
      _
    // Predicated region
    $region6: #{tpu_custom_call.1} parent=1 // pred_check
      _
    $region7: #{tpu_custom_call.1} parent=1 // pred_check_branch
      %25 = sbr.rel (0) target = $region9
    $region8: #{tpu_custom_call.1} parent=1 // pred_region
      %27 = vsyncadd [#allocation6], 0
      %s28 = sshll.u32 %s1, 4
      %s29 = int_to_ptr.hbm [resolvable:$true] %s28
      %s30 = sshll.u32 [#allocation5], 4
      %s31 = int_to_ptr.vmem [resolvable:$true] %s30
      %36 = dma.hbm_to_vmem [thread:$0]  %s29, 40960, %s31, [#allocation6], 256, 256, 16
    $region9: #{tpu_custom_call.1} parent=1 // pred_fallthru
      _
    // Predicated region
    $region10: #{tpu_custom_call.1} parent=1 // pred_check
      _
    $region11: #{tpu_custom_call.1} parent=1 // pred_check_branch
      %38 = sbr.rel (0) target = $region13
    $region12: #{tpu_custom_call.1} parent=1 // pred_region
      %40 = vsyncadd [#allocation6], 0
      %s42 = sshll.u32 %s2, 4
      %s43 = int_to_ptr.hbm [resolvable:$true] %s42
      %s44 = sshll.u32 [#allocation7], 4
      %s45 = int_to_ptr.vmem [resolvable:$true] %s44
      %47 = dma.hbm_to_vmem [thread:$0]  %s43, 32, %s45, [#allocation6]
    $region13: #{tpu_custom_call.1} parent=1 // pred_fallthru
      _
    // Predicated region
    $region14: #{tpu_custom_call.1} parent=1 // pred_check
      _
    $region15: #{tpu_custom_call.1} parent=1 // pred_check_branch
      %49 = sbr.rel (0) target = $region17
    $region16: #{tpu_custom_call.1} parent=1 // pred_region
      %51 = dma.done [#allocation3], 5120
    $region17: #{tpu_custom_call.1} parent=1 // pred_fallthru
      _
    // Predicated region
    $region18: #{tpu_custom_call.1} parent=1 // pred_check
      _
    $region19: #{tpu_custom_call.1} parent=1 // pred_check_branch
      %53 = sbr.rel (0) target = $region21
    $region20: #{tpu_custom_call.1} parent=1 // pred_region
      %55 = dma.done [#allocation6], 40960
    $region21: #{tpu_custom_call.1} parent=1 // pred_fallthru
      _
    // Predicated region
    $region22: #{tpu_custom_call.1} parent=1 // pred_check
      _
    $region23: #{tpu_custom_call.1} parent=1 // pred_check_branch
      %57 = sbr.rel (0) target = $region25
    $region24: #{tpu_custom_call.1} parent=1 // pred_region
      %59 = dma.done [#allocation6], 32
    $region25: #{tpu_custom_call.1} parent=1 // pred_fallthru
      _
    %v60 = vld [vmem:[#allocation2] sm:$0xff]
    %v61 = vld [vmem:[#allocation2 + $0x8] sm:$0xff]
    %v62 = vld [vmem:[#allocation2 + $0x10] sm:$0xff]
    %v63 = vld [vmem:[#allocation2 + $0x18] sm:$0xff]
    %v64 = vld [vmem:[#allocation2 + $0x20] sm:$0xff]
    %v65 = vld [vmem:[#allocation2 + $0x28] sm:$0xff]
    %v66 = vld [vmem:[#allocation2 + $0x30] sm:$0xff]
    %v67 = vld [vmem:[#allocation2 + $0x38] sm:$0xff]
    %v68 = vld [vmem:[#allocation2 + $0x40] sm:$0xff]
    %v69 = vld [vmem:[#allocation2 + $0x48] sm:$0xff]
    %v70 = vld [vmem:[#allocation2 + $0x50] sm:$0xff]
    %v71 = vld [vmem:[#allocation2 + $0x58] sm:$0xff]
    %v72 = vld [vmem:[#allocation2 + $0x60] sm:$0xff]
    %v73 = vld [vmem:[#allocation2 + $0x68] sm:$0xff]
    %v74 = vld [vmem:[#allocation2 + $0x70] sm:$0xff]
    %v75 = vld [vmem:[#allocation2 + $0x78] sm:$0xff]
    %v76 = vld [vmem:[#allocation2 + $0x80] sm:$0xff]
    %v77 = vld [vmem:[#allocation2 + $0x88] sm:$0xff]
    %v78 = vld [vmem:[#allocation2 + $0x90] sm:$0xff]
    %v79 = vld [vmem:[#allocation2 + $0x98] sm:$0xff]
    %v80 = vld [vmem:[#allocation2 + $0xa0] sm:$0xff]
    %v81 = vld [vmem:[#allocation2 + $0xa8] sm:$0xff]
    %v82 = vld [vmem:[#allocation2 + $0xb0] sm:$0xff]
    %v83 = vld [vmem:[#allocation2 + $0xb8] sm:$0xff]
    %v84 = vld [vmem:[#allocation2 + $0xc0] sm:$0xff]
    %v85 = vld [vmem:[#allocation2 + $0xc8] sm:$0xff]
    %v86 = vld [vmem:[#allocation2 + $0xd0] sm:$0xff]
    %v87 = vld [vmem:[#allocation2 + $0xd8] sm:$0xff]
    %v88 = vld [vmem:[#allocation2 + $0xe0] sm:$0xff]
    %v89 = vld [vmem:[#allocation2 + $0xe8] sm:$0xff]
    %v90 = vld [vmem:[#allocation2 + $0xf0] sm:$0xff]
    %v91 = vld [vmem:[#allocation2 + $0xf8] sm:$0xff]
    %v92 = vld [vmem:[#allocation2 + $0x100] sm:$0xff]
    %v93 = vld [vmem:[#allocation2 + $0x108] sm:$0xff]
    %v94 = vld [vmem:[#allocation2 + $0x110] sm:$0xff]
    %v95 = vld [vmem:[#allocation2 + $0x118] sm:$0xff]
    %v96 = vld [vmem:[#allocation2 + $0x120] sm:$0xff]
    %v97 = vld [vmem:[#allocation2 + $0x128] sm:$0xff]
    %v98 = vld [vmem:[#allocation2 + $0x130] sm:$0xff]
    %v99 = vld [vmem:[#allocation2 + $0x138] sm:$0xff]
    %v100 = vadd.f32 %v60, %v70
    %v101 = vrot.slane %v100, 4
    %v102 = vadd.f32 %v100, %v101
    %v103 = vrot.slane %v102, 2
    %v104 = vadd.f32 %v102, %v103
    %v105 = vrot.slane %v104, 1
    %v106 = vadd.f32 %v104, %v105
    %v107 = vadd.f32 %v61, %v71
    %v108 = vrot.slane %v107, 4
    %v109 = vadd.f32 %v107, %v108
    %v110 = vrot.slane %v109, 2
    %v111 = vadd.f32 %v109, %v110
    %v112 = vrot.slane %v111, 1
    %v113 = vadd.f32 %v111, %v112
    %v114 = vadd.f32 %v62, %v72
    %v115 = vrot.slane %v114, 4
    %v116 = vadd.f32 %v114, %v115
    %v117 = vrot.slane %v116, 2
    %v118 = vadd.f32 %v116, %v117
    %v119 = vrot.slane %v118, 1
    %v120 = vadd.f32 %v118, %v119
    %v121 = vadd.f32 %v63, %v73
    %v122 = vrot.slane %v121, 4
    %v123 = vadd.f32 %v121, %v122
    %v124 = vrot.slane %v123, 2
    %v125 = vadd.f32 %v123, %v124
    %v126 = vrot.slane %v125, 1
    %v127 = vadd.f32 %v125, %v126
    %v128 = vadd.f32 %v64, %v74
    %v129 = vrot.slane %v128, 4
    %v130 = vadd.f32 %v128, %v129
    %v131 = vrot.slane %v130, 2
    %v132 = vadd.f32 %v130, %v131
    %v133 = vrot.slane %v132, 1
    %v134 = vadd.f32 %v132, %v133
    %v135 = vadd.f32 %v65, %v75
    %v136 = vrot.slane %v135, 4
    %v137 = vadd.f32 %v135, %v136
    %v138 = vrot.slane %v137, 2
    %v139 = vadd.f32 %v137, %v138
    %v140 = vrot.slane %v139, 1
    %v141 = vadd.f32 %v139, %v140
    %v142 = vadd.f32 %v66, %v76
    %v143 = vrot.slane %v142, 4
    %v144 = vadd.f32 %v142, %v143
    %v145 = vrot.slane %v144, 2
    %v146 = vadd.f32 %v144, %v145
    %v147 = vrot.slane %v146, 1
    %v148 = vadd.f32 %v146, %v147
    %v149 = vadd.f32 %v67, %v77
    %v150 = vrot.slane %v149, 4
    %v151 = vadd.f32 %v149, %v150
    %v152 = vrot.slane %v151, 2
    %v153 = vadd.f32 %v151, %v152
    %v154 = vrot.slane %v153, 1
    %v155 = vadd.f32 %v153, %v154
    %v156 = vadd.f32 %v68, %v78
    %v157 = vrot.slane %v156, 4
    %v158 = vadd.f32 %v156, %v157
    %v159 = vrot.slane %v158, 2
    %v160 = vadd.f32 %v158, %v159
    %v161 = vrot.slane %v160, 1
    %v162 = vadd.f32 %v160, %v161
    %v163 = vadd.f32 %v69, %v79
    %v164 = vrot.slane %v163, 4
    %v165 = vadd.f32 %v163, %v164
    %v166 = vrot.slane %v165, 2
    %v167 = vadd.f32 %v165, %v166
    %v168 = vrot.slane %v167, 1
    %v169 = vadd.f32 %v167, %v168
    %v170 = vadd.f32 %v80, %v90
    %v171 = vrot.slane %v170, 4
    %v172 = vadd.f32 %v170, %v171
    %v173 = vrot.slane %v172, 2
    %v174 = vadd.f32 %v172, %v173
    %v175 = vrot.slane %v174, 1
    %v176 = vadd.f32 %v174, %v175
    %v177 = vadd.f32 %v81, %v91
    %v178 = vrot.slane %v177, 4
    %v179 = vadd.f32 %v177, %v178
    %v180 = vrot.slane %v179, 2
    %v181 = vadd.f32 %v179, %v180
    %v182 = vrot.slane %v181, 1
    %v183 = vadd.f32 %v181, %v182
    %v184 = vadd.f32 %v82, %v92
    %v185 = vrot.slane %v184, 4
    %v186 = vadd.f32 %v184, %v185
    %v187 = vrot.slane %v186, 2
    %v188 = vadd.f32 %v186, %v187
    %v189 = vrot.slane %v188, 1
    %v190 = vadd.f32 %v188, %v189
    %v191 = vadd.f32 %v83, %v93
    %v192 = vrot.slane %v191, 4
    %v193 = vadd.f32 %v191, %v192
    %v194 = vrot.slane %v193, 2
    %v195 = vadd.f32 %v193, %v194
    %v196 = vrot.slane %v195, 1
    %v197 = vadd.f32 %v195, %v196
    %v198 = vadd.f32 %v84, %v94
    %v199 = vrot.slane %v198, 4
    %v200 = vadd.f32 %v198, %v199
    %v201 = vrot.slane %v200, 2
    %v202 = vadd.f32 %v200, %v201
    %v203 = vrot.slane %v202, 1
    %v204 = vadd.f32 %v202, %v203
    %v205 = vadd.f32 %v85, %v95
    %v206 = vrot.slane %v205, 4
    %v207 = vadd.f32 %v205, %v206
    %v208 = vrot.slane %v207, 2
    %v209 = vadd.f32 %v207, %v208
    %v210 = vrot.slane %v209, 1
    %v211 = vadd.f32 %v209, %v210
    %v212 = vadd.f32 %v86, %v96
    %v213 = vrot.slane %v212, 4
    %v214 = vadd.f32 %v212, %v213
    %v215 = vrot.slane %v214, 2
    %v216 = vadd.f32 %v214, %v215
    %v217 = vrot.slane %v216, 1
    %v218 = vadd.f32 %v216, %v217
    %v219 = vadd.f32 %v87, %v97
    %v220 = vrot.slane %v219, 4
    %v221 = vadd.f32 %v219, %v220
    %v222 = vrot.slane %v221, 2
    %v223 = vadd.f32 %v221, %v222
    %v224 = vrot.slane %v223, 1
    %v225 = vadd.f32 %v223, %v224
    %v226 = vadd.f32 %v88, %v98
    %v227 = vrot.slane %v226, 4
    %v228 = vadd.f32 %v226, %v227
    %v229 = vrot.slane %v228, 2
    %v230 = vadd.f32 %v228, %v229
    %v231 = vrot.slane %v230, 1
    %v232 = vadd.f32 %v230, %v231
    %v233 = vadd.f32 %v89, %v99
    %v234 = vrot.slane %v233, 4
    %v235 = vadd.f32 %v233, %v234
    %v236 = vrot.slane %v235, 2
    %v237 = vadd.f32 %v235, %v236
    %v238 = vrot.slane %v237, 1
    %v239 = vadd.f32 %v237, %v238
    %v240 = vmul.f32 %v106, 0.0625
    %v241 = vmul.f32 %v113, 0.0625
    %v242 = vmul.f32 %v120, 0.0625
    %v243 = vmul.f32 %v127, 0.0625
    %v244 = vmul.f32 %v134, 0.0625
    %v245 = vmul.f32 %v141, 0.0625
    %v246 = vmul.f32 %v148, 0.0625
    %v247 = vmul.f32 %v155, 0.0625
    %v248 = vmul.f32 %v162, 0.0625
    %v249 = vmul.f32 %v169, 0.0625
    %v250 = vmul.f32 %v176, 0.0625
    %v251 = vmul.f32 %v183, 0.0625
    %v252 = vmul.f32 %v190, 0.0625
    %v253 = vmul.f32 %v197, 0.0625
    %v254 = vmul.f32 %v204, 0.0625
    %v255 = vmul.f32 %v211, 0.0625
    %v256 = vmul.f32 %v218, 0.0625
    %v257 = vmul.f32 %v225, 0.0625
    %v258 = vmul.f32 %v232, 0.0625
    %v259 = vmul.f32 %v239, 0.0625
    %v260 = vld [vmem:[#allocation5] sm:$0xff]
    %v261 = vld [vmem:[#allocation5 + $0x8] sm:$0xff]
    %v262 = vld [vmem:[#allocation5 + $0x10] sm:$0xff]
    %v263 = vld [vmem:[#allocation5 + $0x18] sm:$0xff]
    %v264 = vld [vmem:[#allocation5 + $0x20] sm:$0xff]
    %v265 = vld [vmem:[#allocation5 + $0x28] sm:$0xff]
    %v266 = vld [vmem:[#allocation5 + $0x30] sm:$0xff]
    %v267 = vld [vmem:[#allocation5 + $0x38] sm:$0xff]
    %v268 = vld [vmem:[#allocation5 + $0x40] sm:$0xff]
    %v269 = vld [vmem:[#allocation5 + $0x48] sm:$0xff]
    %v270 = vld [vmem:[#allocation5 + $0x50] sm:$0xff]
    %v271 = vld [vmem:[#allocation5 + $0x58] sm:$0xff]
    %v272 = vld [vmem:[#allocation5 + $0x60] sm:$0xff]
    %v273 = vld [vmem:[#allocation5 + $0x68] sm:$0xff]
    %v274 = vld [vmem:[#allocation5 + $0x70] sm:$0xff]
    %v275 = vld [vmem:[#allocation5 + $0x78] sm:$0xff]
    %v276 = vld [vmem:[#allocation5 + $0x80] sm:$0xff]
    %v277 = vld [vmem:[#allocation5 + $0x88] sm:$0xff]
    %v278 = vld [vmem:[#allocation5 + $0x90] sm:$0xff]
    %v279 = vld [vmem:[#allocation5 + $0x98] sm:$0xff]
    %v280 = vld [vmem:[#allocation5 + $0xa0] sm:$0xff]
    %v281 = vld [vmem:[#allocation5 + $0xa8] sm:$0xff]
    %v282 = vld [vmem:[#allocation5 + $0xb0] sm:$0xff]
    %v283 = vld [vmem:[#allocation5 + $0xb8] sm:$0xff]
    %v284 = vld [vmem:[#allocation5 + $0xc0] sm:$0xff]
    %v285 = vld [vmem:[#allocation5 + $0xc8] sm:$0xff]
    %v286 = vld [vmem:[#allocation5 + $0xd0] sm:$0xff]
    %v287 = vld [vmem:[#allocation5 + $0xd8] sm:$0xff]
    %v288 = vld [vmem:[#allocation5 + $0xe0] sm:$0xff]
    %v289 = vld [vmem:[#allocation5 + $0xe8] sm:$0xff]
    %v290 = vld [vmem:[#allocation5 + $0xf0] sm:$0xff]
    %v291 = vld [vmem:[#allocation5 + $0xf8] sm:$0xff]
    %v292 = vld [vmem:[#allocation5 + $0x100] sm:$0xff]
    %v293 = vld [vmem:[#allocation5 + $0x108] sm:$0xff]
    %v294 = vld [vmem:[#allocation5 + $0x110] sm:$0xff]
    %v295 = vld [vmem:[#allocation5 + $0x118] sm:$0xff]
    %v296 = vld [vmem:[#allocation5 + $0x120] sm:$0xff]
    %v297 = vld [vmem:[#allocation5 + $0x128] sm:$0xff]
    %v298 = vld [vmem:[#allocation5 + $0x130] sm:$0xff]
    %v299 = vld [vmem:[#allocation5 + $0x138] sm:$0xff]
    %v300 = vld [vmem:[#allocation5 + $0x140] sm:$0xff]
    %v301 = vld [vmem:[#allocation5 + $0x148] sm:$0xff]
    %v302 = vld [vmem:[#allocation5 + $0x150] sm:$0xff]
    %v303 = vld [vmem:[#allocation5 + $0x158] sm:$0xff]
    %v304 = vld [vmem:[#allocation5 + $0x160] sm:$0xff]
    %v305 = vld [vmem:[#allocation5 + $0x168] sm:$0xff]
    %v306 = vld [vmem:[#allocation5 + $0x170] sm:$0xff]
    %v307 = vld [vmem:[#allocation5 + $0x178] sm:$0xff]
    %v308 = vld [vmem:[#allocation5 + $0x180] sm:$0xff]
    %v309 = vld [vmem:[#allocation5 + $0x188] sm:$0xff]
    %v310 = vld [vmem:[#allocation5 + $0x190] sm:$0xff]
    %v311 = vld [vmem:[#allocation5 + $0x198] sm:$0xff]
    %v312 = vld [vmem:[#allocation5 + $0x1a0] sm:$0xff]
    %v313 = vld [vmem:[#allocation5 + $0x1a8] sm:$0xff]
    %v314 = vld [vmem:[#allocation5 + $0x1b0] sm:$0xff]
    %v315 = vld [vmem:[#allocation5 + $0x1b8] sm:$0xff]
    %v316 = vld [vmem:[#allocation5 + $0x1c0] sm:$0xff]
    %v317 = vld [vmem:[#allocation5 + $0x1c8] sm:$0xff]
    %v318 = vld [vmem:[#allocation5 + $0x1d0] sm:$0xff]
    %v319 = vld [vmem:[#allocation5 + $0x1d8] sm:$0xff]
    %v320 = vld [vmem:[#allocation5 + $0x1e0] sm:$0xff]
    %v321 = vld [vmem:[#allocation5 + $0x1e8] sm:$0xff]
    %v322 = vld [vmem:[#allocation5 + $0x1f0] sm:$0xff]
    %v323 = vld [vmem:[#allocation5 + $0x1f8] sm:$0xff]
    %v324 = vld [vmem:[#allocation5 + $0x200] sm:$0xff]
    %v325 = vld [vmem:[#allocation5 + $0x208] sm:$0xff]
    %v326 = vld [vmem:[#allocation5 + $0x210] sm:$0xff]
    %v327 = vld [vmem:[#allocation5 + $0x218] sm:$0xff]
    %v328 = vld [vmem:[#allocation5 + $0x220] sm:$0xff]
    %v329 = vld [vmem:[#allocation5 + $0x228] sm:$0xff]
    %v330 = vld [vmem:[#allocation5 + $0x230] sm:$0xff]
    %v331 = vld [vmem:[#allocation5 + $0x238] sm:$0xff]
    %v332 = vld [vmem:[#allocation5 + $0x240] sm:$0xff]
    %v333 = vld [vmem:[#allocation5 + $0x248] sm:$0xff]
    %v334 = vld [vmem:[#allocation5 + $0x250] sm:$0xff]
    %v335 = vld [vmem:[#allocation5 + $0x258] sm:$0xff]
    %v336 = vld [vmem:[#allocation5 + $0x260] sm:$0xff]
    %v337 = vld [vmem:[#allocation5 + $0x268] sm:$0xff]
    %v338 = vld [vmem:[#allocation5 + $0x270] sm:$0xff]
    %v339 = vld [vmem:[#allocation5 + $0x278] sm:$0xff]
    %v340 = vld [vmem:[#allocation5 + $0x280] sm:$0xff]
    %v341 = vld [vmem:[#allocation5 + $0x288] sm:$0xff]
    %v342 = vld [vmem:[#allocation5 + $0x290] sm:$0xff]
    %v343 = vld [vmem:[#allocation5 + $0x298] sm:$0xff]
    %v344 = vld [vmem:[#allocation5 + $0x2a0] sm:$0xff]
    %v345 = vld [vmem:[#allocation5 + $0x2a8] sm:$0xff]
    %v346 = vld [vmem:[#allocation5 + $0x2b0] sm:$0xff]
    %v347 = vld [vmem:[#allocation5 + $0x2b8] sm:$0xff]
    %v348 = vld [vmem:[#allocation5 + $0x2c0] sm:$0xff]
    %v349 = vld [vmem:[#allocation5 + $0x2c8] sm:$0xff]
    %v350 = vld [vmem:[#allocation5 + $0x2d0] sm:$0xff]
    %v351 = vld [vmem:[#allocation5 + $0x2d8] sm:$0xff]
    %v352 = vld [vmem:[#allocation5 + $0x2e0] sm:$0xff]
    %v353 = vld [vmem:[#allocation5 + $0x2e8] sm:$0xff]
    %v354 = vld [vmem:[#allocation5 + $0x2f0] sm:$0xff]
    %v355 = vld [vmem:[#allocation5 + $0x2f8] sm:$0xff]
    %v356 = vld [vmem:[#allocation5 + $0x300] sm:$0xff]
    %v357 = vld [vmem:[#allocation5 + $0x308] sm:$0xff]
    %v358 = vld [vmem:[#allocation5 + $0x310] sm:$0xff]
    %v359 = vld [vmem:[#allocation5 + $0x318] sm:$0xff]
    %v360 = vld [vmem:[#allocation5 + $0x320] sm:$0xff]
    %v361 = vld [vmem:[#allocation5 + $0x328] sm:$0xff]
    %v362 = vld [vmem:[#allocation5 + $0x330] sm:$0xff]
    %v363 = vld [vmem:[#allocation5 + $0x338] sm:$0xff]
    %v364 = vld [vmem:[#allocation5 + $0x340] sm:$0xff]
    %v365 = vld [vmem:[#allocation5 + $0x348] sm:$0xff]
    %v366 = vld [vmem:[#allocation5 + $0x350] sm:$0xff]
    %v367 = vld [vmem:[#allocation5 + $0x358] sm:$0xff]
    %v368 = vld [vmem:[#allocation5 + $0x360] sm:$0xff]
    %v369 = vld [vmem:[#allocation5 + $0x368] sm:$0xff]
    %v370 = vld [vmem:[#allocation5 + $0x370] sm:$0xff]
    %v371 = vld [vmem:[#allocation5 + $0x378] sm:$0xff]
    %v372 = vld [vmem:[#allocation5 + $0x380] sm:$0xff]
    %v373 = vld [vmem:[#allocation5 + $0x388] sm:$0xff]
    %v374 = vld [vmem:[#allocation5 + $0x390] sm:$0xff]
    %v375 = vld [vmem:[#allocation5 + $0x398] sm:$0xff]
    %v376 = vld [vmem:[#allocation5 + $0x3a0] sm:$0xff]
    %v377 = vld [vmem:[#allocation5 + $0x3a8] sm:$0xff]
    %v378 = vld [vmem:[#allocation5 + $0x3b0] sm:$0xff]
    %v379 = vld [vmem:[#allocation5 + $0x3b8] sm:$0xff]
    %v380 = vld [vmem:[#allocation5 + $0x3c0] sm:$0xff]
    %v381 = vld [vmem:[#allocation5 + $0x3c8] sm:$0xff]
    %v382 = vld [vmem:[#allocation5 + $0x3d0] sm:$0xff]
    %v383 = vld [vmem:[#allocation5 + $0x3d8] sm:$0xff]
    %v384 = vld [vmem:[#allocation5 + $0x3e0] sm:$0xff]
    %v385 = vld [vmem:[#allocation5 + $0x3e8] sm:$0xff]
    %v386 = vld [vmem:[#allocation5 + $0x3f0] sm:$0xff]
    %v387 = vld [vmem:[#allocation5 + $0x3f8] sm:$0xff]
    %v388 = vld [vmem:[#allocation5 + $0x400] sm:$0xff]
    %v389 = vld [vmem:[#allocation5 + $0x408] sm:$0xff]
    %v390 = vld [vmem:[#allocation5 + $0x410] sm:$0xff]
    %v391 = vld [vmem:[#allocation5 + $0x418] sm:$0xff]
    %v392 = vld [vmem:[#allocation5 + $0x420] sm:$0xff]
    %v393 = vld [vmem:[#allocation5 + $0x428] sm:$0xff]
    %v394 = vld [vmem:[#allocation5 + $0x430] sm:$0xff]
    %v395 = vld [vmem:[#allocation5 + $0x438] sm:$0xff]
    %v396 = vld [vmem:[#allocation5 + $0x440] sm:$0xff]
    %v397 = vld [vmem:[#allocation5 + $0x448] sm:$0xff]
    %v398 = vld [vmem:[#allocation5 + $0x450] sm:$0xff]
    %v399 = vld [vmem:[#allocation5 + $0x458] sm:$0xff]
    %v400 = vld [vmem:[#allocation5 + $0x460] sm:$0xff]
    %v401 = vld [vmem:[#allocation5 + $0x468] sm:$0xff]
    %v402 = vld [vmem:[#allocation5 + $0x470] sm:$0xff]
    %v403 = vld [vmem:[#allocation5 + $0x478] sm:$0xff]
    %v404 = vld [vmem:[#allocation5 + $0x480] sm:$0xff]
    %v405 = vld [vmem:[#allocation5 + $0x488] sm:$0xff]
    %v406 = vld [vmem:[#allocation5 + $0x490] sm:$0xff]
    %v407 = vld [vmem:[#allocation5 + $0x498] sm:$0xff]
    %v408 = vld [vmem:[#allocation5 + $0x4a0] sm:$0xff]
    %v409 = vld [vmem:[#allocation5 + $0x4a8] sm:$0xff]
    %v410 = vld [vmem:[#allocation5 + $0x4b0] sm:$0xff]
    %v411 = vld [vmem:[#allocation5 + $0x4b8] sm:$0xff]
    %v412 = vld [vmem:[#allocation5 + $0x4c0] sm:$0xff]
    %v413 = vld [vmem:[#allocation5 + $0x4c8] sm:$0xff]
    %v414 = vld [vmem:[#allocation5 + $0x4d0] sm:$0xff]
    %v415 = vld [vmem:[#allocation5 + $0x4d8] sm:$0xff]
    %v416 = vld [vmem:[#allocation5 + $0x4e0] sm:$0xff]
    %v417 = vld [vmem:[#allocation5 + $0x4e8] sm:$0xff]
    %v418 = vld [vmem:[#allocation5 + $0x4f0] sm:$0xff]
    %v419 = vld [vmem:[#allocation5 + $0x4f8] sm:$0xff]
    %v420 = vld [vmem:[#allocation5 + $0x500] sm:$0xff]
    %v421 = vld [vmem:[#allocation5 + $0x508] sm:$0xff]
    %v422 = vld [vmem:[#allocation5 + $0x510] sm:$0xff]
    %v423 = vld [vmem:[#allocation5 + $0x518] sm:$0xff]
    %v424 = vld [vmem:[#allocation5 + $0x520] sm:$0xff]
    %v425 = vld [vmem:[#allocation5 + $0x528] sm:$0xff]
    %v426 = vld [vmem:[#allocation5 + $0x530] sm:$0xff]
    %v427 = vld [vmem:[#allocation5 + $0x538] sm:$0xff]
    %v428 = vld [vmem:[#allocation5 + $0x540] sm:$0xff]
    %v429 = vld [vmem:[#allocation5 + $0x548] sm:$0xff]
    %v430 = vld [vmem:[#allocation5 + $0x550] sm:$0xff]
    %v431 = vld [vmem:[#allocation5 + $0x558] sm:$0xff]
    %v432 = vld [vmem:[#allocation5 + $0x560] sm:$0xff]
    %v433 = vld [vmem:[#allocation5 + $0x568] sm:$0xff]
    %v434 = vld [vmem:[#allocation5 + $0x570] sm:$0xff]
    %v435 = vld [vmem:[#allocation5 + $0x578] sm:$0xff]
    %v436 = vld [vmem:[#allocation5 + $0x580] sm:$0xff]
    %v437 = vld [vmem:[#allocation5 + $0x588] sm:$0xff]
    %v438 = vld [vmem:[#allocation5 + $0x590] sm:$0xff]
    %v439 = vld [vmem:[#allocation5 + $0x598] sm:$0xff]
    %v440 = vld [vmem:[#allocation5 + $0x5a0] sm:$0xff]
    %v441 = vld [vmem:[#allocation5 + $0x5a8] sm:$0xff]
    %v442 = vld [vmem:[#allocation5 + $0x5b0] sm:$0xff]
    %v443 = vld [vmem:[#allocation5 + $0x5b8] sm:$0xff]
    %v444 = vld [vmem:[#allocation5 + $0x5c0] sm:$0xff]
    %v445 = vld [vmem:[#allocation5 + $0x5c8] sm:$0xff]
    %v446 = vld [vmem:[#allocation5 + $0x5d0] sm:$0xff]
    %v447 = vld [vmem:[#allocation5 + $0x5d8] sm:$0xff]
    %v448 = vld [vmem:[#allocation5 + $0x5e0] sm:$0xff]
    %v449 = vld [vmem:[#allocation5 + $0x5e8] sm:$0xff]
    %v450 = vld [vmem:[#allocation5 + $0x5f0] sm:$0xff]
    %v451 = vld [vmem:[#allocation5 + $0x5f8] sm:$0xff]
    %v452 = vld [vmem:[#allocation5 + $0x600] sm:$0xff]
    %v453 = vld [vmem:[#allocation5 + $0x608] sm:$0xff]
    %v454 = vld [vmem:[#allocation5 + $0x610] sm:$0xff]
    %v455 = vld [vmem:[#allocation5 + $0x618] sm:$0xff]
    %v456 = vld [vmem:[#allocation5 + $0x620] sm:$0xff]
    %v457 = vld [vmem:[#allocation5 + $0x628] sm:$0xff]
    %v458 = vld [vmem:[#allocation5 + $0x630] sm:$0xff]
    %v459 = vld [vmem:[#allocation5 + $0x638] sm:$0xff]
    %v460 = vld [vmem:[#allocation5 + $0x640] sm:$0xff]
    %v461 = vld [vmem:[#allocation5 + $0x648] sm:$0xff]
    %v462 = vld [vmem:[#allocation5 + $0x650] sm:$0xff]
    %v463 = vld [vmem:[#allocation5 + $0x658] sm:$0xff]
    %v464 = vld [vmem:[#allocation5 + $0x660] sm:$0xff]
    %v465 = vld [vmem:[#allocation5 + $0x668] sm:$0xff]
    %v466 = vld [vmem:[#allocation5 + $0x670] sm:$0xff]
    %v467 = vld [vmem:[#allocation5 + $0x678] sm:$0xff]
    %v468 = vld [vmem:[#allocation5 + $0x680] sm:$0xff]
    %v469 = vld [vmem:[#allocation5 + $0x688] sm:$0xff]
    %v470 = vld [vmem:[#allocation5 + $0x690] sm:$0xff]
    %v471 = vld [vmem:[#allocation5 + $0x698] sm:$0xff]
    %v472 = vld [vmem:[#allocation5 + $0x6a0] sm:$0xff]
    %v473 = vld [vmem:[#allocation5 + $0x6a8] sm:$0xff]
    %v474 = vld [vmem:[#allocation5 + $0x6b0] sm:$0xff]
    %v475 = vld [vmem:[#allocation5 + $0x6b8] sm:$0xff]
    %v476 = vld [vmem:[#allocation5 + $0x6c0] sm:$0xff]
    %v477 = vld [vmem:[#allocation5 + $0x6c8] sm:$0xff]
    %v478 = vld [vmem:[#allocation5 + $0x6d0] sm:$0xff]
    %v479 = vld [vmem:[#allocation5 + $0x6d8] sm:$0xff]
    %v480 = vld [vmem:[#allocation5 + $0x6e0] sm:$0xff]
    %v481 = vld [vmem:[#allocation5 + $0x6e8] sm:$0xff]
    %v482 = vld [vmem:[#allocation5 + $0x6f0] sm:$0xff]
    %v483 = vld [vmem:[#allocation5 + $0x6f8] sm:$0xff]
    %v484 = vld [vmem:[#allocation5 + $0x700] sm:$0xff]
    %v485 = vld [vmem:[#allocation5 + $0x708] sm:$0xff]
    %v486 = vld [vmem:[#allocation5 + $0x710] sm:$0xff]
    %v487 = vld [vmem:[#allocation5 + $0x718] sm:$0xff]
    %v488 = vld [vmem:[#allocation5 + $0x720] sm:$0xff]
    %v489 = vld [vmem:[#allocation5 + $0x728] sm:$0xff]
    %v490 = vld [vmem:[#allocation5 + $0x730] sm:$0xff]
    %v491 = vld [vmem:[#allocation5 + $0x738] sm:$0xff]
    %v492 = vld [vmem:[#allocation5 + $0x740] sm:$0xff]
    %v493 = vld [vmem:[#allocation5 + $0x748] sm:$0xff]
    %v494 = vld [vmem:[#allocation5 + $0x750] sm:$0xff]
    %v495 = vld [vmem:[#allocation5 + $0x758] sm:$0xff]
    %v496 = vld [vmem:[#allocation5 + $0x760] sm:$0xff]
    %v497 = vld [vmem:[#allocation5 + $0x768] sm:$0xff]
    %v498 = vld [vmem:[#allocation5 + $0x770] sm:$0xff]
    %v499 = vld [vmem:[#allocation5 + $0x778] sm:$0xff]
    %v500 = vld [vmem:[#allocation5 + $0x780] sm:$0xff]
    %v501 = vld [vmem:[#allocation5 + $0x788] sm:$0xff]
    %v502 = vld [vmem:[#allocation5 + $0x790] sm:$0xff]
    %v503 = vld [vmem:[#allocation5 + $0x798] sm:$0xff]
    %v504 = vld [vmem:[#allocation5 + $0x7a0] sm:$0xff]
    %v505 = vld [vmem:[#allocation5 + $0x7a8] sm:$0xff]
    %v506 = vld [vmem:[#allocation5 + $0x7b0] sm:$0xff]
    %v507 = vld [vmem:[#allocation5 + $0x7b8] sm:$0xff]
    %v508 = vld [vmem:[#allocation5 + $0x7c0] sm:$0xff]
    %v509 = vld [vmem:[#allocation5 + $0x7c8] sm:$0xff]
    %v510 = vld [vmem:[#allocation5 + $0x7d0] sm:$0xff]
    %v511 = vld [vmem:[#allocation5 + $0x7d8] sm:$0xff]
    %v512 = vld [vmem:[#allocation5 + $0x7e0] sm:$0xff]
    %v513 = vld [vmem:[#allocation5 + $0x7e8] sm:$0xff]
    %v514 = vld [vmem:[#allocation5 + $0x7f0] sm:$0xff]
    %v515 = vld [vmem:[#allocation5 + $0x7f8] sm:$0xff]
    %v516 = vld [vmem:[#allocation5 + $0x800] sm:$0xff]
    %v517 = vld [vmem:[#allocation5 + $0x808] sm:$0xff]
    %v518 = vld [vmem:[#allocation5 + $0x810] sm:$0xff]
    %v519 = vld [vmem:[#allocation5 + $0x818] sm:$0xff]
    %v520 = vld [vmem:[#allocation5 + $0x820] sm:$0xff]
    %v521 = vld [vmem:[#allocation5 + $0x828] sm:$0xff]
    %v522 = vld [vmem:[#allocation5 + $0x830] sm:$0xff]
    %v523 = vld [vmem:[#allocation5 + $0x838] sm:$0xff]
    %v524 = vld [vmem:[#allocation5 + $0x840] sm:$0xff]
    %v525 = vld [vmem:[#allocation5 + $0x848] sm:$0xff]
    %v526 = vld [vmem:[#allocation5 + $0x850] sm:$0xff]
    %v527 = vld [vmem:[#allocation5 + $0x858] sm:$0xff]
    %v528 = vld [vmem:[#allocation5 + $0x860] sm:$0xff]
    %v529 = vld [vmem:[#allocation5 + $0x868] sm:$0xff]
    %v530 = vld [vmem:[#allocation5 + $0x870] sm:$0xff]
    %v531 = vld [vmem:[#allocation5 + $0x878] sm:$0xff]
    %v532 = vld [vmem:[#allocation5 + $0x880] sm:$0xff]
    %v533 = vld [vmem:[#allocation5 + $0x888] sm:$0xff]
    %v534 = vld [vmem:[#allocation5 + $0x890] sm:$0xff]
    %v535 = vld [vmem:[#allocation5 + $0x898] sm:$0xff]
    %v536 = vld [vmem:[#allocation5 + $0x8a0] sm:$0xff]
    %v537 = vld [vmem:[#allocation5 + $0x8a8] sm:$0xff]
    %v538 = vld [vmem:[#allocation5 + $0x8b0] sm:$0xff]
    %v539 = vld [vmem:[#allocation5 + $0x8b8] sm:$0xff]
    %v540 = vld [vmem:[#allocation5 + $0x8c0] sm:$0xff]
    %v541 = vld [vmem:[#allocation5 + $0x8c8] sm:$0xff]
    %v542 = vld [vmem:[#allocation5 + $0x8d0] sm:$0xff]
    %v543 = vld [vmem:[#allocation5 + $0x8d8] sm:$0xff]
    %v544 = vld [vmem:[#allocation5 + $0x8e0] sm:$0xff]
    %v545 = vld [vmem:[#allocation5 + $0x8e8] sm:$0xff]
    %v546 = vld [vmem:[#allocation5 + $0x8f0] sm:$0xff]
    %v547 = vld [vmem:[#allocation5 + $0x8f8] sm:$0xff]
    %v548 = vld [vmem:[#allocation5 + $0x900] sm:$0xff]
    %v549 = vld [vmem:[#allocation5 + $0x908] sm:$0xff]
    %v550 = vld [vmem:[#allocation5 + $0x910] sm:$0xff]
    %v551 = vld [vmem:[#allocation5 + $0x918] sm:$0xff]
    %v552 = vld [vmem:[#allocation5 + $0x920] sm:$0xff]
    %v553 = vld [vmem:[#allocation5 + $0x928] sm:$0xff]
    %v554 = vld [vmem:[#allocation5 + $0x930] sm:$0xff]
    %v555 = vld [vmem:[#allocation5 + $0x938] sm:$0xff]
    %v556 = vld [vmem:[#allocation5 + $0x940] sm:$0xff]
    %v557 = vld [vmem:[#allocation5 + $0x948] sm:$0xff]
    %v558 = vld [vmem:[#allocation5 + $0x950] sm:$0xff]
    %v559 = vld [vmem:[#allocation5 + $0x958] sm:$0xff]
    %v560 = vld [vmem:[#allocation5 + $0x960] sm:$0xff]
    %v561 = vld [vmem:[#allocation5 + $0x968] sm:$0xff]
    %v562 = vld [vmem:[#allocation5 + $0x970] sm:$0xff]
    %v563 = vld [vmem:[#allocation5 + $0x978] sm:$0xff]
    %v564 = vld [vmem:[#allocation5 + $0x980] sm:$0xff]
    %v565 = vld [vmem:[#allocation5 + $0x988] sm:$0xff]
    %v566 = vld [vmem:[#allocation5 + $0x990] sm:$0xff]
    %v567 = vld [vmem:[#allocation5 + $0x998] sm:$0xff]
    %v568 = vld [vmem:[#allocation5 + $0x9a0] sm:$0xff]
    %v569 = vld [vmem:[#allocation5 + $0x9a8] sm:$0xff]
    %v570 = vld [vmem:[#allocation5 + $0x9b0] sm:$0xff]
    %v571 = vld [vmem:[#allocation5 + $0x9b8] sm:$0xff]
    %v572 = vld [vmem:[#allocation5 + $0x9c0] sm:$0xff]
    %v573 = vld [vmem:[#allocation5 + $0x9c8] sm:$0xff]
    %v574 = vld [vmem:[#allocation5 + $0x9d0] sm:$0xff]
    %v575 = vld [vmem:[#allocation5 + $0x9d8] sm:$0xff]
    %v576 = vld [vmem:[#allocation5 + $0x9e0] sm:$0xff]
    %v577 = vld [vmem:[#allocation5 + $0x9e8] sm:$0xff]
    %v578 = vld [vmem:[#allocation5 + $0x9f0] sm:$0xff]
    %v579 = vld [vmem:[#allocation5 + $0x9f8] sm:$0xff]
    %v580 = vld [vmem:[#allocation7] sm:$0x3]
    %v582 = vperm.slane %v580, 0
    %v583 = vperm.slane %v580, 1
    %vm606 = vcmask 1041409
    %v607 = vsel %vm606, %v250, %v240
    %v608 = vsel %vm606, %v251, %v241
    %v609 = vsel %vm606, %v252, %v242
    %v610 = vsel %vm606, %v253, %v243
    %v611 = vsel %vm606, %v254, %v244
    %v612 = vsel %vm606, %v255, %v245
    %v613 = vsel %vm606, %v256, %v246
    %v614 = vsel %vm606, %v257, %v247
    %v615 = vsel %vm606, %v258, %v248
    %v616 = vsel %vm606, %v259, %v249
    %627 = vmatpush.msra.mxu0 %v290
    %628 = vmatpush.msra.mxu0 %v288
    %629 = vmatpush.msra.mxu0 %v286
    %630 = vmatpush.msra.mxu0 %v284
    %631 = vmatpush.msra.mxu0 %v282
    %632 = vmatpush.msra.mxu0 %v280
    %633 = vmatpush.msra.mxu0 %v278
    %634 = vmatpush.msra.mxu0 %v276
    %635 = vmatpush.msra.mxu0 %v274
    %636 = vmatpush.msra.mxu0 %v272
    %637 = vmatpush.msra.mxu0 %v270
    %638 = vmatpush.msra.mxu0 %v268
    %639 = vmatpush.msra.mxu0 %v266
    %640 = vmatpush.msra.mxu0 %v264
    %641 = vmatpush.msra.mxu0 %v262
    %642 = vmatpush.msra.mxu0 %v260
    %643 = vmatmul.f32.gmra.mxu0 %v607
    %v644 = vpop.f32.mrf.mxu0
    %v645 = vadd.f32 %v582, %v644
    %646 = vdwg.mxu0
    %647 = vmatpush.msra.mxu0 %v322
    %648 = vmatpush.msra.mxu0 %v320
    %649 = vmatpush.msra.mxu0 %v318
    %650 = vmatpush.msra.mxu0 %v316
    %651 = vmatpush.msra.mxu0 %v314
    %652 = vmatpush.msra.mxu0 %v312
    %653 = vmatpush.msra.mxu0 %v310
    %654 = vmatpush.msra.mxu0 %v308
    %655 = vmatpush.msra.mxu0 %v306
    %656 = vmatpush.msra.mxu0 %v304
    %657 = vmatpush.msra.mxu0 %v302
    %658 = vmatpush.msra.mxu0 %v300
    %659 = vmatpush.msra.mxu0 %v298
    %660 = vmatpush.msra.mxu0 %v296
    %661 = vmatpush.msra.mxu0 %v294
    %662 = vmatpush.msra.mxu0 %v292
    %663 = vmatmul.f32.gmra.mxu0 %v608
    %v664 = vpop.f32.mrf.mxu0
    %v665 = vadd.f32 %v645, %v664
    %666 = vdwg.mxu0
    %667 = vmatpush.msra.mxu0 %v354
    %668 = vmatpush.msra.mxu0 %v352
    %669 = vmatpush.msra.mxu0 %v350
    %670 = vmatpush.msra.mxu0 %v348
    %671 = vmatpush.msra.mxu0 %v346
    %672 = vmatpush.msra.mxu0 %v344
    %673 = vmatpush.msra.mxu0 %v342
    %674 = vmatpush.msra.mxu0 %v340
    %675 = vmatpush.msra.mxu0 %v338
    %676 = vmatpush.msra.mxu0 %v336
    %677 = vmatpush.msra.mxu0 %v334
    %678 = vmatpush.msra.mxu0 %v332
    %679 = vmatpush.msra.mxu0 %v330
    %680 = vmatpush.msra.mxu0 %v328
    %681 = vmatpush.msra.mxu0 %v326
    %682 = vmatpush.msra.mxu0 %v324
    %683 = vmatmul.f32.gmra.mxu0 %v609
    %v684 = vpop.f32.mrf.mxu0
    %v685 = vadd.f32 %v665, %v684
    %686 = vdwg.mxu0
    %687 = vmatpush.msra.mxu0 %v386
    %688 = vmatpush.msra.mxu0 %v384
    %689 = vmatpush.msra.mxu0 %v382
    %690 = vmatpush.msra.mxu0 %v380
    %691 = vmatpush.msra.mxu0 %v378
    %692 = vmatpush.msra.mxu0 %v376
    %693 = vmatpush.msra.mxu0 %v374
    %694 = vmatpush.msra.mxu0 %v372
    %695 = vmatpush.msra.mxu0 %v370
    %696 = vmatpush.msra.mxu0 %v368
    %697 = vmatpush.msra.mxu0 %v366
    %698 = vmatpush.msra.mxu0 %v364
    %699 = vmatpush.msra.mxu0 %v362
    %700 = vmatpush.msra.mxu0 %v360
    %701 = vmatpush.msra.mxu0 %v358
    %702 = vmatpush.msra.mxu0 %v356
    %703 = vmatmul.f32.gmra.mxu0 %v610
    %v704 = vpop.f32.mrf.mxu0
    %v705 = vadd.f32 %v685, %v704
    %706 = vdwg.mxu0
    %707 = vmatpush.msra.mxu0 %v418
    %708 = vmatpush.msra.mxu0 %v416
    %709 = vmatpush.msra.mxu0 %v414
    %710 = vmatpush.msra.mxu0 %v412
    %711 = vmatpush.msra.mxu0 %v410
    %712 = vmatpush.msra.mxu0 %v408
    %713 = vmatpush.msra.mxu0 %v406
    %714 = vmatpush.msra.mxu0 %v404
    %715 = vmatpush.msra.mxu0 %v402
    %716 = vmatpush.msra.mxu0 %v400
    %717 = vmatpush.msra.mxu0 %v398
    %718 = vmatpush.msra.mxu0 %v396
    %719 = vmatpush.msra.mxu0 %v394
    %720 = vmatpush.msra.mxu0 %v392
    %721 = vmatpush.msra.mxu0 %v390
    %722 = vmatpush.msra.mxu0 %v388
    %723 = vmatmul.f32.gmra.mxu0 %v611
    %v724 = vpop.f32.mrf.mxu0
    %v725 = vadd.f32 %v705, %v724
    %726 = vdwg.mxu0
    %727 = vmatpush.msra.mxu0 %v450
    %728 = vmatpush.msra.mxu0 %v448
    %729 = vmatpush.msra.mxu0 %v446
    %730 = vmatpush.msra.mxu0 %v444
    %731 = vmatpush.msra.mxu0 %v442
    %732 = vmatpush.msra.mxu0 %v440
    %733 = vmatpush.msra.mxu0 %v438
    %734 = vmatpush.msra.mxu0 %v436
    %735 = vmatpush.msra.mxu0 %v434
    %736 = vmatpush.msra.mxu0 %v432
    %737 = vmatpush.msra.mxu0 %v430
    %738 = vmatpush.msra.mxu0 %v428
    %739 = vmatpush.msra.mxu0 %v426
    %740 = vmatpush.msra.mxu0 %v424
    %741 = vmatpush.msra.mxu0 %v422
    %742 = vmatpush.msra.mxu0 %v420
    %743 = vmatmul.f32.gmra.mxu0 %v612
    %v744 = vpop.f32.mrf.mxu0
    %v745 = vadd.f32 %v725, %v744
    %746 = vdwg.mxu0
    %747 = vmatpush.msra.mxu0 %v482
    %748 = vmatpush.msra.mxu0 %v480
    %749 = vmatpush.msra.mxu0 %v478
    %750 = vmatpush.msra.mxu0 %v476
    %751 = vmatpush.msra.mxu0 %v474
    %752 = vmatpush.msra.mxu0 %v472
    %753 = vmatpush.msra.mxu0 %v470
    %754 = vmatpush.msra.mxu0 %v468
    %755 = vmatpush.msra.mxu0 %v466
    %756 = vmatpush.msra.mxu0 %v464
    %757 = vmatpush.msra.mxu0 %v462
    %758 = vmatpush.msra.mxu0 %v460
    %759 = vmatpush.msra.mxu0 %v458
    %760 = vmatpush.msra.mxu0 %v456
    %761 = vmatpush.msra.mxu0 %v454
    %762 = vmatpush.msra.mxu0 %v452
    %763 = vmatmul.f32.gmra.mxu0 %v613
    %v764 = vpop.f32.mrf.mxu0
    %v765 = vadd.f32 %v745, %v764
    %766 = vdwg.mxu0
    %767 = vmatpush.msra.mxu0 %v514
    %768 = vmatpush.msra.mxu0 %v512
    %769 = vmatpush.msra.mxu0 %v510
    %770 = vmatpush.msra.mxu0 %v508
    %771 = vmatpush.msra.mxu0 %v506
    %772 = vmatpush.msra.mxu0 %v504
    %773 = vmatpush.msra.mxu0 %v502
    %774 = vmatpush.msra.mxu0 %v500
    %775 = vmatpush.msra.mxu0 %v498
    %776 = vmatpush.msra.mxu0 %v496
    %777 = vmatpush.msra.mxu0 %v494
    %778 = vmatpush.msra.mxu0 %v492
    %779 = vmatpush.msra.mxu0 %v490
    %780 = vmatpush.msra.mxu0 %v488
    %781 = vmatpush.msra.mxu0 %v486
    %782 = vmatpush.msra.mxu0 %v484
    %783 = vmatmul.f32.gmra.mxu0 %v614
    %v784 = vpop.f32.mrf.mxu0
    %v785 = vadd.f32 %v765, %v784
    %786 = vdwg.mxu0
    %787 = vmatpush.msra.mxu0 %v546
    %788 = vmatpush.msra.mxu0 %v544
    %789 = vmatpush.msra.mxu0 %v542
    %790 = vmatpush.msra.mxu0 %v540
    %791 = vmatpush.msra.mxu0 %v538
    %792 = vmatpush.msra.mxu0 %v536
    %793 = vmatpush.msra.mxu0 %v534
    %794 = vmatpush.msra.mxu0 %v532
    %795 = vmatpush.msra.mxu0 %v530
    %796 = vmatpush.msra.mxu0 %v528
    %797 = vmatpush.msra.mxu0 %v526
    %798 = vmatpush.msra.mxu0 %v524
    %799 = vmatpush.msra.mxu0 %v522
    %800 = vmatpush.msra.mxu0 %v520
    %801 = vmatpush.msra.mxu0 %v518
    %802 = vmatpush.msra.mxu0 %v516
    %803 = vmatmul.f32.gmra.mxu0 %v615
    %v804 = vpop.f32.mrf.mxu0
    %v805 = vadd.f32 %v785, %v804
    %806 = vdwg.mxu0
    %807 = vmatpush.msra.mxu0 %v578
    %808 = vmatpush.msra.mxu0 %v576
    %809 = vmatpush.msra.mxu0 %v574
    %810 = vmatpush.msra.mxu0 %v572
    %811 = vmatpush.msra.mxu0 %v570
    %812 = vmatpush.msra.mxu0 %v568
    %813 = vmatpush.msra.mxu0 %v566
    %814 = vmatpush.msra.mxu0 %v564
    %815 = vmatpush.msra.mxu0 %v562
    %816 = vmatpush.msra.mxu0 %v560
    %817 = vmatpush.msra.mxu0 %v558
    %818 = vmatpush.msra.mxu0 %v556
    %819 = vmatpush.msra.mxu0 %v554
    %820 = vmatpush.msra.mxu0 %v552
    %821 = vmatpush.msra.mxu0 %v550
    %822 = vmatpush.msra.mxu0 %v548
    %823 = vmatmul.f32.gmra.mxu0 %v616
    %v824 = vpop.f32.mrf.mxu0
    %v825 = vadd.f32 %v805, %v824
    %826 = vdwg.mxu0
    %827 = vmatpush.msra.mxu0 %v291
    %828 = vmatpush.msra.mxu0 %v289
    %829 = vmatpush.msra.mxu0 %v287
    %830 = vmatpush.msra.mxu0 %v285
    %831 = vmatpush.msra.mxu0 %v283
    %832 = vmatpush.msra.mxu0 %v281
    %833 = vmatpush.msra.mxu0 %v279
    %834 = vmatpush.msra.mxu0 %v277
    %835 = vmatpush.msra.mxu0 %v275
    %836 = vmatpush.msra.mxu0 %v273
    %837 = vmatpush.msra.mxu0 %v271
    %838 = vmatpush.msra.mxu0 %v269
    %839 = vmatpush.msra.mxu0 %v267
    %840 = vmatpush.msra.mxu0 %v265
    %841 = vmatpush.msra.mxu0 %v263
    %842 = vmatpush.msra.mxu0 %v261
    %843 = vmatmul.f32.gmra.mxu0 %v607
    %v844 = vpop.f32.mrf.mxu0
    %v845 = vadd.f32 %v583, %v844
    %846 = vdwg.mxu0
    %847 = vmatpush.msra.mxu0 %v323
    %848 = vmatpush.msra.mxu0 %v321
    %849 = vmatpush.msra.mxu0 %v319
    %850 = vmatpush.msra.mxu0 %v317
    %851 = vmatpush.msra.mxu0 %v315
    %852 = vmatpush.msra.mxu0 %v313
    %853 = vmatpush.msra.mxu0 %v311
    %854 = vmatpush.msra.mxu0 %v309
    %855 = vmatpush.msra.mxu0 %v307
    %856 = vmatpush.msra.mxu0 %v305
    %857 = vmatpush.msra.mxu0 %v303
    %858 = vmatpush.msra.mxu0 %v301
    %859 = vmatpush.msra.mxu0 %v299
    %860 = vmatpush.msra.mxu0 %v297
    %861 = vmatpush.msra.mxu0 %v295
    %862 = vmatpush.msra.mxu0 %v293
    %863 = vmatmul.f32.gmra.mxu0 %v608
    %v864 = vpop.f32.mrf.mxu0
    %v865 = vadd.f32 %v845, %v864
    %866 = vdwg.mxu0
    %867 = vmatpush.msra.mxu0 %v355
    %868 = vmatpush.msra.mxu0 %v353
    %869 = vmatpush.msra.mxu0 %v351
    %870 = vmatpush.msra.mxu0 %v349
    %871 = vmatpush.msra.mxu0 %v347
    %872 = vmatpush.msra.mxu0 %v345
    %873 = vmatpush.msra.mxu0 %v343
    %874 = vmatpush.msra.mxu0 %v341
    %875 = vmatpush.msra.mxu0 %v339
    %876 = vmatpush.msra.mxu0 %v337
    %877 = vmatpush.msra.mxu0 %v335
    %878 = vmatpush.msra.mxu0 %v333
    %879 = vmatpush.msra.mxu0 %v331
    %880 = vmatpush.msra.mxu0 %v329
    %881 = vmatpush.msra.mxu0 %v327
    %882 = vmatpush.msra.mxu0 %v325
    %883 = vmatmul.f32.gmra.mxu0 %v609
    %v884 = vpop.f32.mrf.mxu0
    %v885 = vadd.f32 %v865, %v884
    %886 = vdwg.mxu0
    %887 = vmatpush.msra.mxu0 %v387
    %888 = vmatpush.msra.mxu0 %v385
    %889 = vmatpush.msra.mxu0 %v383
    %890 = vmatpush.msra.mxu0 %v381
    %891 = vmatpush.msra.mxu0 %v379
    %892 = vmatpush.msra.mxu0 %v377
    %893 = vmatpush.msra.mxu0 %v375
    %894 = vmatpush.msra.mxu0 %v373
    %895 = vmatpush.msra.mxu0 %v371
    %896 = vmatpush.msra.mxu0 %v369
    %897 = vmatpush.msra.mxu0 %v367
    %898 = vmatpush.msra.mxu0 %v365
    %899 = vmatpush.msra.mxu0 %v363
    %900 = vmatpush.msra.mxu0 %v361
    %901 = vmatpush.msra.mxu0 %v359
    %902 = vmatpush.msra.mxu0 %v357
    %903 = vmatmul.f32.gmra.mxu0 %v610
    %v904 = vpop.f32.mrf.mxu0
    %v905 = vadd.f32 %v885, %v904
    %906 = vdwg.mxu0
    %907 = vmatpush.msra.mxu0 %v419
    %908 = vmatpush.msra.mxu0 %v417
    %909 = vmatpush.msra.mxu0 %v415
    %910 = vmatpush.msra.mxu0 %v413
    %911 = vmatpush.msra.mxu0 %v411
    %912 = vmatpush.msra.mxu0 %v409
    %913 = vmatpush.msra.mxu0 %v407
    %914 = vmatpush.msra.mxu0 %v405
    %915 = vmatpush.msra.mxu0 %v403
    %916 = vmatpush.msra.mxu0 %v401
    %917 = vmatpush.msra.mxu0 %v399
    %918 = vmatpush.msra.mxu0 %v397
    %919 = vmatpush.msra.mxu0 %v395
    %920 = vmatpush.msra.mxu0 %v393
    %921 = vmatpush.msra.mxu0 %v391
    %922 = vmatpush.msra.mxu0 %v389
    %923 = vmatmul.f32.gmra.mxu0 %v611
    %v924 = vpop.f32.mrf.mxu0
    %v925 = vadd.f32 %v905, %v924
    %926 = vdwg.mxu0
    %927 = vmatpush.msra.mxu0 %v451
    %928 = vmatpush.msra.mxu0 %v449
    %929 = vmatpush.msra.mxu0 %v447
    %930 = vmatpush.msra.mxu0 %v445
    %931 = vmatpush.msra.mxu0 %v443
    %932 = vmatpush.msra.mxu0 %v441
    %933 = vmatpush.msra.mxu0 %v439
    %934 = vmatpush.msra.mxu0 %v437
    %935 = vmatpush.msra.mxu0 %v435
    %936 = vmatpush.msra.mxu0 %v433
    %937 = vmatpush.msra.mxu0 %v431
    %938 = vmatpush.msra.mxu0 %v429
    %939 = vmatpush.msra.mxu0 %v427
    %940 = vmatpush.msra.mxu0 %v425
    %941 = vmatpush.msra.mxu0 %v423
    %942 = vmatpush.msra.mxu0 %v421
    %943 = vmatmul.f32.gmra.mxu0 %v612
    %v944 = vpop.f32.mrf.mxu0
    %v945 = vadd.f32 %v925, %v944
    %946 = vdwg.mxu0
    %947 = vmatpush.msra.mxu0 %v483
    %948 = vmatpush.msra.mxu0 %v481
    %949 = vmatpush.msra.mxu0 %v479
    %950 = vmatpush.msra.mxu0 %v477
    %951 = vmatpush.msra.mxu0 %v475
    %952 = vmatpush.msra.mxu0 %v473
    %953 = vmatpush.msra.mxu0 %v471
    %954 = vmatpush.msra.mxu0 %v469
    %955 = vmatpush.msra.mxu0 %v467
    %956 = vmatpush.msra.mxu0 %v465
    %957 = vmatpush.msra.mxu0 %v463
    %958 = vmatpush.msra.mxu0 %v461
    %959 = vmatpush.msra.mxu0 %v459
    %960 = vmatpush.msra.mxu0 %v457
    %961 = vmatpush.msra.mxu0 %v455
    %962 = vmatpush.msra.mxu0 %v453
    %963 = vmatmul.f32.gmra.mxu0 %v613
    %v964 = vpop.f32.mrf.mxu0
    %v965 = vadd.f32 %v945, %v964
    %966 = vdwg.mxu0
    %967 = vmatpush.msra.mxu0 %v515
    %968 = vmatpush.msra.mxu0 %v513
    %969 = vmatpush.msra.mxu0 %v511
    %970 = vmatpush.msra.mxu0 %v509
    %971 = vmatpush.msra.mxu0 %v507
    %972 = vmatpush.msra.mxu0 %v505
    %973 = vmatpush.msra.mxu0 %v503
    %974 = vmatpush.msra.mxu0 %v501
    %975 = vmatpush.msra.mxu0 %v499
    %976 = vmatpush.msra.mxu0 %v497
    %977 = vmatpush.msra.mxu0 %v495
    %978 = vmatpush.msra.mxu0 %v493
    %979 = vmatpush.msra.mxu0 %v491
    %980 = vmatpush.msra.mxu0 %v489
    %981 = vmatpush.msra.mxu0 %v487
    %982 = vmatpush.msra.mxu0 %v485
    %983 = vmatmul.f32.gmra.mxu0 %v614
    %v984 = vpop.f32.mrf.mxu0
    %v985 = vadd.f32 %v965, %v984
    %986 = vdwg.mxu0
    %987 = vmatpush.msra.mxu0 %v547
    %988 = vmatpush.msra.mxu0 %v545
    %989 = vmatpush.msra.mxu0 %v543
    %990 = vmatpush.msra.mxu0 %v541
    %991 = vmatpush.msra.mxu0 %v539
    %992 = vmatpush.msra.mxu0 %v537
    %993 = vmatpush.msra.mxu0 %v535
    %994 = vmatpush.msra.mxu0 %v533
    %995 = vmatpush.msra.mxu0 %v531
    %996 = vmatpush.msra.mxu0 %v529
    %997 = vmatpush.msra.mxu0 %v527
    %998 = vmatpush.msra.mxu0 %v525
    %999 = vmatpush.msra.mxu0 %v523
    %1000 = vmatpush.msra.mxu0 %v521
    %1001 = vmatpush.msra.mxu0 %v519
    %1002 = vmatpush.msra.mxu0 %v517
    %1003 = vmatmul.f32.gmra.mxu0 %v615
    %v1004 = vpop.f32.mrf.mxu0
    %v1005 = vadd.f32 %v985, %v1004
    %1006 = vdwg.mxu0
    %1007 = vmatpush.msra.mxu0 %v579
    %1008 = vmatpush.msra.mxu0 %v577
    %1009 = vmatpush.msra.mxu0 %v575
    %1010 = vmatpush.msra.mxu0 %v573
    %1011 = vmatpush.msra.mxu0 %v571
    %1012 = vmatpush.msra.mxu0 %v569
    %1013 = vmatpush.msra.mxu0 %v567
    %1014 = vmatpush.msra.mxu0 %v565
    %1015 = vmatpush.msra.mxu0 %v563
    %1016 = vmatpush.msra.mxu0 %v561
    %1017 = vmatpush.msra.mxu0 %v559
    %1018 = vmatpush.msra.mxu0 %v557
    %1019 = vmatpush.msra.mxu0 %v555
    %1020 = vmatpush.msra.mxu0 %v553
    %1021 = vmatpush.msra.mxu0 %v551
    %1022 = vmatpush.msra.mxu0 %v549
    %1023 = vmatmul.f32.gmra.mxu0 %v616
    %v1024 = vpop.f32.mrf.mxu0
    %v1025 = vadd.f32 %v1005, %v1024
    %1026 = vdwg.mxu0
    %v1029 = vrot.slane %v1025, 6
    %vm1030 = vcmask 1041408
    %v1031 = vsel %vm1030, %v825, %v1029
    %1033 = vst [vmem:[#allocation8] sm:$0xf] %v1031
    // Predicated region
    $region26: #{tpu_custom_call.1} parent=1 // pred_check
      _
    $region27: #{tpu_custom_call.1} parent=1 // pred_check_branch
      %1035 = sbr.rel (0) target = $region29
    $region28: #{tpu_custom_call.1} parent=1 // pred_region
      %1037 = vsyncadd [#allocation4], 0
      %s1039 = sshll.u32 [#allocation8], 4
      %s1040 = int_to_ptr.vmem [resolvable:$true] %s1039
      %s1041 = sshll.u32 %s3, 4
      %s1042 = int_to_ptr.hbm [resolvable:$true] %s1041
      %1044 = dma.vmem_to_hbm [thread:$0]  %s1040, 64, %s1042, [#allocation4]
    $region29: #{tpu_custom_call.1} parent=1 // pred_fallthru
      _
    // Predicated region
    $region30: #{tpu_custom_call.1} parent=1 // pred_check
      _
    $region31: #{tpu_custom_call.1} parent=1 // pred_check_branch
      %1046 = sbr.rel (0) target = $region33
    $region32: #{tpu_custom_call.1} parent=1 // pred_region
      %1048 = dma.done [#allocation4], 64
    $region33: #{tpu_custom_call.1} parent=1 // pred_fallthru
      _
    %1049 = vsyncpa [#allocation3], 1
    %1050 = vsyncpa [#allocation6], 1
    %1051 = vsyncpa [#allocation4], 1

</llo_original>
